<compile_context>
chip_gen: v6e
topology: v6e:2x2x1
jax: 0.10.0
libtpu: 0.0.40
codegen_flags: <defaults>
</compile_context>

<pallas_src>
import functools
import math

import jax
import jax.numpy as jnp
from jax import lax
from jax.experimental import pallas as pl
from jax.experimental.pallas import tpu as pltpu

F32 = jnp.float32
BF16 = jnp.bfloat16

# Scoped VMEM limit: 64 MiB is <= physical on v5e/v6e (128 MiB) and v7x (64 MiB)
# while raising the conservative 16/32 MiB defaults.
VMEM_LIMIT = 64 * 1024 * 1024

# Tile targets (MXU / lane aligned). At the toy test shapes every dim is small,
# so blocks fall back to the full dimension (still legal: block == full dim).
TM, TN, TK = 256, 512, 512


def _tile(dim, target):
    """Block size for one axis: full dim if small or non-divisible, else target."""
    if dim <= target or dim % target != 0:
        # TODO(synk): pad non-divisible dims (e.g. vocab=30522) to a multiple of
        # the tile instead of falling back to a single full-width block.
        return dim
    return target


def _gelu(x):
    # tanh approximation of GELU (BERT 'gelu_new'); exact erf GELU differs slightly.
    return 0.5 * x * (1.0 + jnp.tanh(0.7978845608028654 * (x + 0.044715 * x * x * x)))


# ----------------------------------------------------------------------------
# Tiled linear:  y = act(x @ w + b)
# ----------------------------------------------------------------------------
def _matmul_kernel(act, x_ref, w_ref, b_ref, o_ref, acc_ref):
    k = pl.program_id(2)

    @pl.when(k == 0)
    def _():
        acc_ref[...] = jnp.zeros_like(acc_ref)

    acc_ref[...] += jnp.dot(x_ref[...], w_ref[...], preferred_element_type=F32)

    @pl.when(k == pl.num_programs(2) - 1)
    def _():
        y = acc_ref[...] + b_ref[...].astype(F32)
        if act == "gelu":
            y = _gelu(y)
        o_ref[...] = y.astype(o_ref.dtype)


def linear(x, w, b, act="none", out_dtype=BF16):
    """y = act(x @ w + b); x: (M, K), w: (K, N), b: (N,). bf16 MXU, f32 accumulate."""
    M, K = x.shape
    N = w.shape[1]
    x = x.astype(BF16)
    w = w.astype(BF16)
    tm, tn, tk = _tile(M, TM), _tile(N, TN), _tile(K, TK)
    out_bytes = M * N * jnp.dtype(out_dtype).itemsize
    cost = pl.CostEstimate(flops=2 * M * N * K,
                           transcendentals=(M * N if act == "gelu" else 0),
                           bytes_accessed=x.nbytes + w.nbytes + b.nbytes + out_bytes)
    return pl.pallas_call(
        functools.partial(_matmul_kernel, act),
        out_shape=jax.ShapeDtypeStruct((M, N), out_dtype),
        grid=(M // tm, N // tn, K // tk),
        in_specs=[pl.BlockSpec((tm, tk), lambda i, j, k: (i, k)),
                  pl.BlockSpec((tk, tn), lambda i, j, k: (k, j)),
                  pl.BlockSpec((1, tn), lambda i, j, k: (0, j))],
        out_specs=pl.BlockSpec((tm, tn), lambda i, j, k: (i, j)),
        scratch_shapes=[pltpu.VMEM((tm, tn), F32)],
        compiler_params=pltpu.CompilerParams(
            dimension_semantics=("parallel", "parallel", "arbitrary"),
            vmem_limit_bytes=VMEM_LIMIT),
        cost_estimate=cost,
    )(x, w, b.reshape(1, N))


# ----------------------------------------------------------------------------
# Fused linear [+ gelu] [+ residual] + LayerNorm  (N = full hidden width)
# ----------------------------------------------------------------------------
def _matmul_ln_kernel(act, has_residual, *args):
    if has_residual:
        x_ref, w_ref, b_ref, r_ref, g_ref, bb_ref, o_ref, acc_ref = args
    else:
        x_ref, w_ref, b_ref, g_ref, bb_ref, o_ref, acc_ref = args
        r_ref = None
    k = pl.program_id(1)

    @pl.when(k == 0)
    def _():
        acc_ref[...] = jnp.zeros_like(acc_ref)

    acc_ref[...] += jnp.dot(x_ref[...], w_ref[...], preferred_element_type=F32)

    @pl.when(k == pl.num_programs(1) - 1)
    def _():
        y = acc_ref[...] + b_ref[...].astype(F32)
        if act == "gelu":
            y = _gelu(y)
        if r_ref is not None:
            y = y + r_ref[...].astype(F32)
        mu = jnp.mean(y, axis=-1, keepdims=True)
        var = jnp.mean(jnp.square(y - mu), axis=-1, keepdims=True)
        yn = (y - mu) * lax.rsqrt(var + 1e-12)
        o_ref[...] = (yn * g_ref[...].astype(F32)
                      + bb_ref[...].astype(F32)).astype(o_ref.dtype)


def linear_ln(x, w, b, gamma, beta, residual=None, act="none", out_dtype=BF16):
    """LayerNorm(act(x @ w + b) [+ residual]) — fused epilogue, N kept un-tiled."""
    M, K = x.shape
    N = w.shape[1]
    x = x.astype(BF16)
    w = w.astype(BF16)
    tm, tk = _tile(M, TM), _tile(K, TK)

    in_specs = [pl.BlockSpec((tm, tk), lambda i, k: (i, k)),
                pl.BlockSpec((tk, N), lambda i, k: (k, 0)),
                pl.BlockSpec((1, N), lambda i, k: (0, 0))]
    args = [x, w, b.reshape(1, N)]
    if residual is not None:
        in_specs.append(pl.BlockSpec((tm, N), lambda i, k: (i, 0)))
        args.append(residual)
    in_specs += [pl.BlockSpec((1, N), lambda i, k: (0, 0)),
                 pl.BlockSpec((1, N), lambda i, k: (0, 0))]
    args += [gamma.reshape(1, N), beta.reshape(1, N)]

    out_bytes = M * N * jnp.dtype(out_dtype).itemsize
    cost = pl.CostEstimate(flops=2 * M * N * K + 8 * M * N,
                           transcendentals=(M * N if act == "gelu" else 0),
                           bytes_accessed=x.nbytes + w.nbytes + out_bytes
                           + (residual.nbytes if residual is not None else 0))
    return pl.pallas_call(
        functools.partial(_matmul_ln_kernel, act, residual is not None),
        out_shape=jax.ShapeDtypeStruct((M, N), out_dtype),
        grid=(M // tm, K // tk),
        in_specs=in_specs,
        out_specs=pl.BlockSpec((tm, N), lambda i, k: (i, 0)),
        scratch_shapes=[pltpu.VMEM((tm, N), F32)],
        compiler_params=pltpu.CompilerParams(
            dimension_semantics=("parallel", "arbitrary"),
            vmem_limit_bytes=VMEM_LIMIT),
        cost_estimate=cost,
    )(*args)


# ----------------------------------------------------------------------------
# Standalone LayerNorm (embedding output)
# ----------------------------------------------------------------------------
def _layernorm_kernel(x_ref, g_ref, b_ref, o_ref):
    x = x_ref[...].astype(F32)
    mu = jnp.mean(x, axis=-1, keepdims=True)
    var = jnp.mean(jnp.square(x - mu), axis=-1, keepdims=True)
    y = (x - mu) * lax.rsqrt(var + 1e-12)
    o_ref[...] = (y * g_ref[...] + b_ref[...]).astype(o_ref.dtype)


def layernorm(x, g, b, out_dtype=BF16):
    M, H = x.shape
    tm = _tile(M, TM)
    return pl.pallas_call(
        _layernorm_kernel,
        out_shape=jax.ShapeDtypeStruct((M, H), out_dtype),
        grid=(M // tm,),
        in_specs=[pl.BlockSpec((tm, H), lambda i: (i, 0)),
                  pl.BlockSpec((1, H), lambda i: (0, 0)),
                  pl.BlockSpec((1, H), lambda i: (0, 0))],
        out_specs=pl.BlockSpec((tm, H), lambda i: (i, 0)),
        compiler_params=pltpu.CompilerParams(
            dimension_semantics=("parallel",),
            vmem_limit_bytes=VMEM_LIMIT),
    )(x, g.reshape(1, H), b.reshape(1, H))


# ----------------------------------------------------------------------------
# Multi-head attention: packed (B, S, H) layout, grid over batch, heads looped
# inside the kernel (lane-dense (S, H) output blocks, no JAX-side transposes).
# ----------------------------------------------------------------------------
def _attn_kernel(scale, num_heads, dh, q_ref, k_ref, v_ref, m_ref, o_ref):
    q_all = q_ref[0].astype(F32) * scale          # (S, H) — scale folded into q
    k_all = k_ref[0].astype(F32)
    v_all = v_ref[0].astype(F32)
    bias = m_ref[0]                               # (1, S) additive mask
    outs = []
    for h in range(num_heads):
        sl = slice(h * dh, (h + 1) * dh)
        # contract on last axes of q and k — no materialized k.T
        s = lax.dot_general(q_all[:, sl], k_all[:, sl],
                            (((1,), (1,)), ((), ())),
                            preferred_element_type=F32) + bias       # (S, S)
        s = s - jnp.max(s, axis=-1, keepdims=True)
        p = jnp.exp(s)
        p = p * pl.reciprocal(jnp.sum(p, axis=-1, keepdims=True), approx=True)
        outs.append(jnp.dot(p, v_all[:, sl], preferred_element_type=F32))
    o_ref[0] = jnp.concatenate(outs, axis=-1).astype(o_ref.dtype)


def attention(q, k, v, mask_bias, num_heads):
    """q, k, v: (B, S, H) bf16; mask_bias: (B, 1, S) additive f32. Returns (B, S, H) bf16."""
    B, S, H = q.shape
    dh = H // num_heads
    scale = 1.0 / math.sqrt(dh)
    # TODO(synk): for S >= ~1024, switch to a flash-style online-softmax kernel
    # tiled over the KV axis instead of materializing the full (S, S) scores.
    return pl.pallas_call(
        functools.partial(_attn_kernel, scale, num_heads, dh),
        out_shape=jax.ShapeDtypeStruct((B, S, H), BF16),
        grid=(B,),
        in_specs=[pl.BlockSpec((1, S, H), lambda b: (b, 0, 0)),
                  pl.BlockSpec((1, S, H), lambda b: (b, 0, 0)),
                  pl.BlockSpec((1, S, H), lambda b: (b, 0, 0)),
                  pl.BlockSpec((1, 1, S), lambda b: (b, 0, 0))],
        out_specs=pl.BlockSpec((1, S, H), lambda b: (b, 0, 0)),
        compiler_params=pltpu.CompilerParams(
            dimension_semantics=("parallel",),
            vmem_limit_bytes=VMEM_LIMIT),
    )(q, k, v, mask_bias)


# ----------------------------------------------------------------------------
# Parameter init (deterministic, synthetic — no checkpoint loading)
# ----------------------------------------------------------------------------
def init_params(key, cfg):
    H, I, V = cfg["hidden"], cfg["intermediate"], cfg["vocab"]

    def nrm(k, shape, dtype=BF16):
        return (0.02 * jax.random.normal(k, shape, dtype=F32)).astype(dtype)

    keys = iter(jax.random.split(key, 8 + 8 * cfg["layers"]))
    word_emb = nrm(next(keys), (V, H), F32)
    params = {
        "word_emb": word_emb,
        "pos_emb": nrm(next(keys), (cfg["max_pos"], H), F32),
        "type_emb": nrm(next(keys), (cfg["type_vocab"], H), F32),
        "emb_ln_g": jnp.ones((H,), F32), "emb_ln_b": jnp.zeros((H,), F32),
        "tr_w": nrm(next(keys), (H, H)), "tr_b": jnp.zeros((H,), F32),
        "tr_ln_g": jnp.ones((H,), F32), "tr_ln_b": jnp.zeros((H,), F32),
        # tied decoder weight, transposed ONCE at init (no per-forward .T)
        "dec_w": word_emb.T.astype(BF16),
        "dec_b": jnp.zeros((V,), F32),
        "layers": [],
    }
    for _ in range(cfg["layers"]):
        layer = {
            # fused Q/K/V projection: (H, 3H)
            "qkv_w": nrm(next(keys), (H, 3 * H)), "qkv_b": jnp.zeros((3 * H,), F32),
            "ao_w": nrm(next(keys), (H, H)), "ao_b": jnp.zeros((H,), F32),
            "ln1_g": jnp.ones((H,), F32), "ln1_b": jnp.zeros((H,), F32),
            "i_w": nrm(next(keys), (H, I)), "i_b": jnp.zeros((I,), F32),
            "o_w": nrm(next(keys), (I, H)), "o_b": jnp.zeros((H,), F32),
            "ln2_g": jnp.ones((H,), F32), "ln2_b": jnp.zeros((H,), F32),
        }
        params["layers"].append(layer)
    return params


# ----------------------------------------------------------------------------
# Forward pass: Bert_Model.forward -> (B, S, vocab) MLM logits
# ----------------------------------------------------------------------------
def bert_model_forward(params, input_ids, attention_mask, token_type_ids, cfg):
    B, S = input_ids.shape
    H = cfg["hidden"]
    M = B * S

    # Embeddings (gathers are glue; LN is a Pallas kernel). Hidden states bf16.
    pos_ids = jnp.broadcast_to(jnp.arange(S)[None, :], (B, S))
    emb = (params["word_emb"][input_ids]
           + params["pos_emb"][pos_ids]
           + params["type_emb"][token_type_ids])                     # (B, S, H) f32
    h = layernorm(emb.reshape(M, H), params["emb_ln_g"], params["emb_ln_b"])

    # Extended attention mask (BERT): (1 - mask) * -10000, additive on scores
    mask_bias = ((1.0 - attention_mask.astype(F32)) * -10000.0).reshape(B, 1, S)

    for layer in params["layers"]:
        # fused QKV projection (1 kernel, 1 read of h)
        qkv = linear(h, layer["qkv_w"], layer["qkv_b"]).reshape(B, S, 3 * H)
        q, k, v = qkv[..., :H], qkv[..., H:2 * H], qkv[..., 2 * H:]
        ctx = attention(q, k, v, mask_bias, cfg["heads"]).reshape(M, H)
        # attention output projection fused with residual + LayerNorm
        h = linear_ln(ctx, layer["ao_w"], layer["ao_b"],
                      layer["ln1_g"], layer["ln1_b"], residual=h)
        inter = linear(h, layer["i_w"], layer["i_b"], act="gelu")
        # FFN output projection fused with residual + LayerNorm
        h = linear_ln(inter, layer["o_w"], layer["o_b"],
                      layer["ln2_g"], layer["ln2_b"], residual=h)

    # MLM head: transform (dense + gelu + LN fused) then tied decoder to vocab
    t = linear_ln(h, params["tr_w"], params["tr_b"],
                  params["tr_ln_g"], params["tr_ln_b"], act="gelu")
    logits = linear(t, params["dec_w"], params["dec_b"], out_dtype=F32)
    return logits.reshape(B, S, cfg["vocab"])


# ----------------------------------------------------------------------------
if __name__ == "__main__":
    cfg = dict(vocab=128, hidden=32, layers=2, heads=4,
               intermediate=64, max_pos=16, type_vocab=2)
    B, S = 2, 8

    key = jax.random.PRNGKey(0)
    k_par, k_ids, k_typ = jax.random.split(key, 3)

    params = init_params(k_par, cfg)

    input_ids = jax.random.randint(k_ids, (B, S), 0, cfg["vocab"], dtype=jnp.int32)
    attention_mask = jnp.array([[1, 1, 1, 1, 1, 1, 1, 1],
                                [1, 1, 1, 1, 1, 1, 0, 0]], dtype=jnp.int32)
    token_type_ids = jax.random.randint(k_typ, (B, S), 0, cfg["type_vocab"],
                                        dtype=jnp.int32)

    logits = bert_model_forward(params, input_ids, attention_mask,
                                token_type_ids, cfg)
    logits = jax.block_until_ready(logits)

    assert logits.shape == (B, S, cfg["vocab"])
    assert logits.dtype == jnp.float32
    assert bool(jnp.all(jnp.isfinite(logits)))
    print("KERNEL_OK")
</pallas_src>

<mosaic_0001>
module attributes {stable_mosaic.version = 11 : i64} {
  func.func @_layernorm_kernel(%arg0: i32, %arg1: memref<16x32xf32, #tpu.memory_space<vmem>>, %arg2: memref<1x32xf32, #tpu.memory_space<vmem>>, %arg3: memref<1x32xf32, #tpu.memory_space<vmem>>, %arg4: memref<16x32xbf16, #tpu.memory_space<vmem>>) attributes {dimension_semantics = [#tpu.dimension_semantics<parallel>], iteration_bounds = array<i64: 1>, scalar_prefetch = 0 : i64, scratch_operands = 0 : i64, tpu.core_type = #tpu.core_type<tc>, window_params = [{transform_indices = @transform_0, window_bounds = array<i64: 16, 32>}, {pipeline_mode = #tpu.pipeline_mode<synchronous>, transform_indices = @transform_1, window_bounds = array<i64: 1, 32>}, {pipeline_mode = #tpu.pipeline_mode<synchronous>, transform_indices = @transform_2, window_bounds = array<i64: 1, 32>}, {transform_indices = @transform_3, window_bounds = array<i64: 16, 32>}]} {
    %c0 = arith.constant 0 : index
    %c0_0 = arith.constant 0 : index
    %0 = vector.load %arg1[%c0, %c0_0] : memref<16x32xf32, #tpu.memory_space<vmem>>, vector<16x32xf32>
    %cst = arith.constant dense<0.000000e+00> : vector<16xf32>
    %1 = vector.multi_reduction <add>, %0, %cst [1] : vector<16x32xf32> to vector<16xf32>
    %2 = vector.shape_cast %1 : vector<16xf32> to vector<16x1xf32>
    %cst_1 = arith.constant 3.200000e+01 : f32
    %3 = vector.broadcast %cst_1 : f32 to vector<16x1xf32>
    %4 = arith.divf %2, %3 : vector<16x1xf32>
    %5 = vector.broadcast %4 : vector<16x1xf32> to vector<16x32xf32>
    %6 = arith.subf %0, %5 : vector<16x32xf32>
    %7 = arith.mulf %6, %6 : vector<16x32xf32>
    %cst_2 = arith.constant dense<0.000000e+00> : vector<16xf32>
    %8 = vector.multi_reduction <add>, %7, %cst_2 [1] : vector<16x32xf32> to vector<16xf32>
    %9 = vector.shape_cast %8 : vector<16xf32> to vector<16x1xf32>
    %cst_3 = arith.constant 3.200000e+01 : f32
    %10 = vector.broadcast %cst_3 : f32 to vector<16x1xf32>
    %11 = arith.divf %9, %10 : vector<16x1xf32>
    %12 = vector.broadcast %4 : vector<16x1xf32> to vector<16x32xf32>
    %13 = arith.subf %0, %12 : vector<16x32xf32>
    %cst_4 = arith.constant 9.99999996E-13 : f32
    %14 = vector.broadcast %cst_4 : f32 to vector<16x1xf32>
    %15 = arith.addf %11, %14 : vector<16x1xf32>
    %16 = math.rsqrt %15 : vector<16x1xf32>
    %17 = vector.broadcast %16 : vector<16x1xf32> to vector<16x32xf32>
    %18 = arith.mulf %13, %17 : vector<16x32xf32>
    %c0_5 = arith.constant 0 : index
    %c0_6 = arith.constant 0 : index
    %19 = vector.load %arg2[%c0_5, %c0_6] : memref<1x32xf32, #tpu.memory_space<vmem>>, vector<1x32xf32>
    %20 = vector.broadcast %19 : vector<1x32xf32> to vector<16x32xf32>
    %21 = arith.mulf %18, %20 : vector<16x32xf32>
    %c0_7 = arith.constant 0 : index
    %c0_8 = arith.constant 0 : index
    %22 = vector.load %arg3[%c0_7, %c0_8] : memref<1x32xf32, #tpu.memory_space<vmem>>, vector<1x32xf32>
    %23 = vector.broadcast %22 : vector<1x32xf32> to vector<16x32xf32>
    %24 = arith.addf %21, %23 : vector<16x32xf32>
    %25 = arith.truncf %24 : vector<16x32xf32> to vector<16x32xbf16>
    %c0_9 = arith.constant 0 : index
    %c0_10 = arith.constant 0 : index
    %26 = vector.load %arg4[%c0_9, %c0_10] : memref<16x32xbf16, #tpu.memory_space<vmem>>, vector<16x32xbf16>
    tpu.vector_store %arg4[%c0_9, %c0_10], %25 {strides = array<i32>} : memref<16x32xbf16, #tpu.memory_space<vmem>>, vector<16x32xbf16>,
    return
  }
  func.func @transform_0(%arg0: i32) -> (i32, i32) {
    %c0_i32 = arith.constant 0 : i32
    %c0_i32_0 = arith.constant 0 : i32
    return %arg0, %c0_i32 : i32, i32
  }
  func.func @transform_1(%arg0: i32) -> (i32, i32) {
    %c0_i32 = arith.constant 0 : i32
    %c0_i32_0 = arith.constant 0 : i32
    %c0_i32_1 = arith.constant 0 : i32
    return %c0_i32, %c0_i32_0 : i32, i32
  }
  func.func @transform_2(%arg0: i32) -> (i32, i32) {
    %c0_i32 = arith.constant 0 : i32
    %c0_i32_0 = arith.constant 0 : i32
    %c0_i32_1 = arith.constant 0 : i32
    return %c0_i32, %c0_i32_0 : i32, i32
  }
  func.func @transform_3(%arg0: i32) -> (i32, i32) {
    %c0_i32 = arith.constant 0 : i32
    %c0_i32_0 = arith.constant 0 : i32
    return %arg0, %c0_i32 : i32, i32
  }
}

</mosaic_0001>

<llo_original>
// kernel: tpu_custom_call.1
$region0: #{tpu_custom_call.1}
  #allocation0 [shape = 'u32[]', space=smem, size = 0x4, offset = 0x4, fixed_abs, tag = 'smem constant byte address 0x4 - core index']
  #allocation1 [shape = 'u32[144,128]{1,0:T(1,128)}', space=vmem, size = 0x12000, scoped, tag = 'internal scratch']
  %s0 = inlined_call_operand.hbm [shape: f32[16,32], index: 0, kind: input, shape index: {}]
  %s1 = inlined_call_operand.vmem [shape: f32[1,32], index: 1, kind: input, shape index: {}]
  %s2 = inlined_call_operand.vmem [shape: f32[1,32], index: 2, kind: input, shape index: {}]
  %s3 = inlined_call_operand.hbm [shape: bf16[16,32], index: 3, kind: output, shape index: {}]
  %s4 = sld [smem:[#allocation0]]
  $region26: #{tpu_custom_call.1} parent=0
    _
  %s6 = ssub.s32 1, %s4
  %s7 = scalar_select 0, %s6, %s4
  $region1: #{tpu_custom_call.1} parent=0
    #allocation2 [shape = 'u8[8192]{0}', space=vmem, size = 0x2000, scoped, tag = 'input window, operand 0, single buffered']
    #allocation3 [shape = 's32[1]{0}', space=sflag, size = 0x4, scoped, tag = 'scoped memory for tpu_custom_call.1']
    #allocation4 [shape = 's32[1]{0}', space=sflag, size = 0x4, scoped, tag = 'scoped memory for tpu_custom_call.1']
    #allocation5 [shape = 'u8[4096]{0}', space=vmem, size = 0x1000, scoped, tag = 'output window, operand 0, single buffered']
    %8 = vsyncpa [#allocation3], 0
    %9 = vsyncpa [#allocation4], 0
    // Predicated region
    $region2: #{tpu_custom_call.1} parent=1 // pred_check
      _
    $region3: #{tpu_custom_call.1} parent=1 // pred_check_branch
      %11 = sbr.rel (0) target = $region5
    $region4: #{tpu_custom_call.1} parent=1 // pred_region
      %s13 = ssub.s32 256, 256
      %14 = vsyncadd [#allocation3], %s13
      %s15 = sshll.u32 [#allocation2], 4
      %s16 = int_to_ptr.vmem [resolvable:$true] %s15
      %21 = dma.hbm_to_vmem [thread:$0]  %s0, 256, %s16, [#allocation3], 128, 128, 8
    $region5: #{tpu_custom_call.1} parent=1 // pred_fallthru
      _
    // Predicated region
    $region6: #{tpu_custom_call.1} parent=1 // pred_check
      _
    $region7: #{tpu_custom_call.1} parent=1 // pred_check_branch
      %23 = sbr.rel (0) target = $region9
    $region8: #{tpu_custom_call.1} parent=1 // pred_region
      _
    $region9: #{tpu_custom_call.1} parent=1 // pred_fallthru
      _
    // Predicated region
    $region10: #{tpu_custom_call.1} parent=1 // pred_check
      _
    $region11: #{tpu_custom_call.1} parent=1 // pred_check_branch
      %25 = sbr.rel (0) target = $region13
    $region12: #{tpu_custom_call.1} parent=1 // pred_region
      _
    $region13: #{tpu_custom_call.1} parent=1 // pred_fallthru
      _
    // Predicated region
    $region14: #{tpu_custom_call.1} parent=1 // pred_check
      _
    $region15: #{tpu_custom_call.1} parent=1 // pred_check_branch
      %27 = sbr.rel (0) target = $region17
    $region16: #{tpu_custom_call.1} parent=1 // pred_region
      %28 = dma.done [#allocation3], 256
    $region17: #{tpu_custom_call.1} parent=1 // pred_fallthru
      _
    %v29 = vld [vmem:[#allocation2] sm:$0xff]
    %v30 = vld [vmem:[#allocation2 + $0x8] sm:$0xff]
    %vm31 = vcmask 261120
    %v32 = vsel %vm31, %v29, 0.0
    %33 = vadd.xlane.f32.xlu0 %v32
    %v34 = vpop.xlane.xlu0 %33
    %v35 = vsel %vm31, %v30, 0.0
    %36 = vadd.xlane.f32.xlu0 %v35
    %v37 = vpop.xlane.xlu0 %36
    %v38 = vrcp.pop 32.0
    %v39 = vmul.f32 %v34, %v38
    %v40 = vmul.f32 %v37, %v38
    %v41 = vsub.f32 %v29, %v39
    %v42 = vsub.f32 %v30, %v40
    %v43 = vmul.f32 %v41, %v41
    %v44 = vmul.f32 %v42, %v42
    %v45 = vsel %vm31, %v43, 0.0
    %46 = vadd.xlane.f32.xlu0 %v45
    %v47 = vpop.xlane.xlu0 %46
    %v48 = vsel %vm31, %v44, 0.0
    %49 = vadd.xlane.f32.xlu0 %v48
    %v50 = vpop.xlane.xlu0 %49
    %v51 = vmul.f32 %v47, %v38
    %v52 = vmul.f32 %v50, %v38
    %v53 = vadd.f32 %v51, 1e-12
    %v54 = vadd.f32 %v52, 1e-12
    %v55 = vrsqrt.pop %v53
    %v56 = vrsqrt.pop %v54
    %v57 = vmul.f32 %v41, %v55
    %v58 = vmul.f32 %v42, %v56
    %v59 = vld [vmem:[%s1] sm:$0x1]
    %v61 = vlaneseq
    %v62 = vshrl.u32 %v61, 7
    %v63 = vsub.s32 0, %v62
    %v64 = vrot.slane %v59, %v63
    %v66 = vmul.f32 %v57, %v64
    %v67 = vmul.f32 %v58, %v64
    %v68 = vld [vmem:[%s2] sm:$0x1]
    %v70 = vlaneseq
    %v71 = vshrl.u32 %v70, 7
    %v72 = vsub.s32 0, %v71
    %v73 = vrot.slane %v68, %v72
    %v75 = vadd.f32 %v66, %v73
    %v76 = vadd.f32 %v67, %v73
    %v77 = vpack.c.bf16 %v76, %v75
    %v79 = vunpack.c.l.b16 %v77
    %v80 = vunpack.c.h.b16 %v77
    %v81 = vpack.c.b16 %v79, %v79
    %v82 = vpack.c.b16 %v80, %v80
    %vm85 = vcmask 257024
    %86 = vst.msk [vmem:[#allocation5] sm:$0xf] %vm85, %v81
    %87 = vst.msk [vmem:[#allocation5 + $0x4] sm:$0xf] %vm85, %v82
    // Predicated region
    $region18: #{tpu_custom_call.1} parent=1 // pred_check
      _
    $region19: #{tpu_custom_call.1} parent=1 // pred_check_branch
      %89 = sbr.rel (0) target = $region21
    $region20: #{tpu_custom_call.1} parent=1 // pred_region
      %s91 = ssub.s32 128, 128
      %92 = vsyncadd [#allocation4], %s91
      %s93 = sshll.u32 [#allocation5], 4
      %s94 = int_to_ptr.vmem [resolvable:$true] %s93
      %99 = dma.vmem_to_hbm [thread:$0]  %s94, 128, %s3, [#allocation4], 64, 64, 4
    $region21: #{tpu_custom_call.1} parent=1 // pred_fallthru
      _
    // Predicated region
    $region22: #{tpu_custom_call.1} parent=1 // pred_check
      _
    $region23: #{tpu_custom_call.1} parent=1 // pred_check_branch
      %101 = sbr.rel (0) target = $region25
    $region24: #{tpu_custom_call.1} parent=1 // pred_region
      %102 = dma.done [#allocation4], 128
    $region25: #{tpu_custom_call.1} parent=1 // pred_fallthru
      _
    %103 = vsyncpa [#allocation3], 1
    %104 = vsyncpa [#allocation4], 1

</llo_original>
